<compile_context>
chip_gen: v7x
topology: tpu7x:2x2x1
jax: 0.10.0
libtpu: 0.0.40
codegen_flags: <defaults>
</compile_context>

<pallas_src>
import numpy as np
import jax
import jax.numpy as jnp
from jax.experimental import pallas as pl
from jax.experimental.pallas import tpu as pltpu


# ---------------------------------------------------------------------------
# Host-side (numpy) construction of the static sampling taps.
# ---------------------------------------------------------------------------
def _pano_grid_taps(H, W, N, D, Hd, Wd, camera_height, max_height, plane_scale):
    """8 trilinear corner taps (zi, yi, xi, weight), each (N, H, W), for the
    PanoRenderer grid with align_corners=False and padding_mode='zeros'."""
    _x, _y = np.meshgrid(np.linspace(0.0, 1.0, H), np.linspace(0.0, 1.0, W),
                         indexing='ij')
    lat = (0.5 - _x) * np.pi
    lon = (-0.5 - 2.0 * _y) * np.pi
    ax1 = np.cos(lat) * np.cos(lon)
    ax2 = -np.cos(lat) * np.sin(lon)
    ax3 = np.sin(lat)

    origin_z = -1.0 + camera_height * 2.0 / plane_scale
    slen = (np.arange(1, N + 1, dtype=np.float64) / N)[:, None, None]   # (N,1,1)
    gx = slen * ax1[None]                                                # (N,H,W)
    gy = slen * ax2[None]
    gz_raw = origin_z + slen * ax3[None]
    grid_min, grid_max = -1.0, -1.0 + max_height * 2.0 / plane_scale
    gz = (gz_raw - grid_min) / (grid_max - grid_min) * 2.0 - 1.0

    def unnorm(g, S):                      # align_corners=False
        return ((g + 1.0) * S - 1.0) / 2.0

    def taps_1d(v, S):
        v0 = np.floor(v).astype(np.int64)
        v1 = v0 + 1
        w1 = v - v0
        w0 = 1.0 - w1
        out = []
        for idx, w in ((v0, w0), (v1, w1)):
            inb = (idx >= 0) & (idx <= S - 1)        # zeros padding: OOB -> w=0
            out.append((np.clip(idx, 0, S - 1), w * inb))
        return out

    tz = taps_1d(unnorm(gz, D), D)
    ty = taps_1d(unnorm(gy, Hd), Hd)
    tx = taps_1d(unnorm(gx, Wd), Wd)

    corners = []
    for zi, wz in tz:
        for yi, wy in ty:
            for xi, wx in tx:
                corners.append((zi, yi, xi, wz * wy * wx))
    return corners


def _build_sampling_operator(H, W, N, C, Hd, Wd, camera_height, max_height,
                             plane_scale, use_ground, intv, tile_p,
                             weight_dtype=jnp.bfloat16):
    """Dense sampling operator over the *variable* voxel channels plus the
    constant ground-plane bias, with intv folded in and pre-tiled into a
    block-contiguous (n_tiles, N, K, tile_p) layout (one contiguous DMA per
    grid step).  M is stored in `weight_dtype` (bf16 by default), bias in f32."""
    D = C + 1 if use_ground else C
    corners = _pano_grid_taps(H, W, N, D, Hd, Wd,
                              camera_height, max_height, plane_scale)
    K = C * Hd * Wd
    P = H * W
    assert P % tile_p == 0
    n_tiles = P // tile_p

    M = np.zeros((N, K, P), np.float64)
    bias = np.zeros((N, P), np.float64)

    n_idx, h_idx, w_idx = np.meshgrid(np.arange(N), np.arange(H), np.arange(W),
                                      indexing='ij')
    p_idx = h_idx * W + w_idx

    for zi, yi, xi, w in corners:
        if use_ground:
            g = (zi == 0) & (w != 0)                       # ground channel
            np.add.at(bias, (n_idx[g], p_idx[g]), 1000.0 * w[g])
            v = (zi > 0) & (w != 0)
            c = zi - 1
        else:
            v = (w != 0)
            c = zi
        k_idx = c * (Hd * Wd) + yi * Wd + xi
        np.add.at(M, (n_idx[v], k_idx[v], p_idx[v]), w[v])

    M *= intv                      # fold sigma_delta = sampled * intv into M
    bias *= intv

    # Block-contiguous layout: M_t[j, n, k, t] = M[n, k, j*tile_p + t]
    M_t = np.ascontiguousarray(
        M.reshape(N, K, n_tiles, tile_p).transpose(2, 0, 1, 3))
    b_t = np.ascontiguousarray(
        bias.reshape(N, n_tiles, tile_p).transpose(1, 0, 2)).reshape(
            n_tiles, N, 1, tile_p)

    M_host = M_t.astype(np.float32).astype(weight_dtype)   # bf16 storage
    b_host = b_t.astype(np.float32)                        # bias stays f32
    return M_host, b_host


def _pick_tile(P, K, weight_bytes=2, max_tile=2048, min_parallel_tiles=4,
               max_block_bytes=24 << 20):
    """Largest lane-dense pixel-tile width that (a) fits the double-buffered M
    block in VMEM and (b) leaves >= min_parallel_tiles tiles on the parallel
    axis so both v7x TensorCores stay busy (harmless on single-TC v5e/v6e)."""
    cands = [t for t in range(128, min(P, max_tile) + 1, 128) if P % t == 0]
    if not cands:
        raise ValueError("H*W must be a multiple of 128")
    fit = [t for t in cands if 2 * K * t * weight_bytes <= max_block_bytes]
    cands = fit or cands[:1]
    for min_tiles in (min_parallel_tiles, 2, 1):
        ok = [t for t in cands if P // t >= min_tiles]
        if ok:
            return max(ok)
    return max(cands)


# ---------------------------------------------------------------------------
# Pallas PanoRenderer
# ---------------------------------------------------------------------------
def make_pano_renderer(BS, H, W, C, Hd, Wd, *, camera_height=2.0, max_height=64.0,
                       plane_scale=128.0, total_sample_len=64.0,
                       total_sample_num=300, use_ground=True, tile_p=None,
                       weight_dtype=jnp.bfloat16):
    B = int(BS)
    N = int(total_sample_num)
    K = C * Hd * Wd
    P = H * W
    intv = float(total_sample_len) / float(N)
    weight_bytes = int(np.dtype(weight_dtype).itemsize)
    if tile_p is None:
        tile_p = _pick_tile(P, K, weight_bytes=weight_bytes)
    assert P % tile_p == 0 and tile_p % 128 == 0
    n_tiles = P // tile_p

    M_host, b_host = _build_sampling_operator(
        H, W, N, C, Hd, Wd, camera_height, max_height, plane_scale, use_ground,
        intv, tile_p, weight_dtype=weight_dtype)
    M_dev = jnp.asarray(M_host)      # (n_tiles, N, K, tile_p)  bf16
    b_dev = jnp.asarray(b_host)      # (n_tiles, N, 1, tile_p)  f32

    def kernel(vox_ref, m_ref, b_ref, depth_ref, opac_ref, t_sc):
        # NOTE: correctness of this init/accumulate pattern requires the depth
        # axis (grid axis 1) to stay the innermost, "arbitrary" axis; megacore
        # sharding happens only along the pixel-tile ("parallel") axis 0.
        n = pl.program_id(1)

        @pl.when(n == 0)
        def _():
            t_sc[...] = jnp.ones_like(t_sc)
            depth_ref[...] = jnp.zeros_like(depth_ref)
            opac_ref[...] = jnp.zeros_like(opac_ref)

        # grid_sample (all three linear interps, * intv, + ground plane) as ONE
        # lane-dense bf16 MXU matmul accumulated in f32.
        sigma = jnp.dot(vox_ref[...], m_ref[...],
                        preferred_element_type=jnp.float32) + b_ref[...]  # (B, tile_p)

        # Volume rendering with multiplicatively carried transmittance.
        e = jnp.exp(-sigma)
        prob = t_sc[...] * (1.0 - e)
        depth_n = (n + 1).astype(jnp.float32) * intv
        depth_ref[...] += depth_n * prob
        opac_ref[...] += prob
        t_sc[...] *= e

    grid_spec = pltpu.PrefetchScalarGridSpec(
        num_scalar_prefetch=0,
        grid=(n_tiles, N),                                  # (pixel tiles, depth)
        in_specs=[
            # voxel (B, K) bf16: VMEM-resident for the whole grid
            pl.BlockSpec((B, K), lambda j, n: (0, 0)),
            # sampling operator: block-contiguous (K, tile_p) slabs
            pl.BlockSpec((pl.Squeezed(), pl.Squeezed(), K, tile_p),
                         lambda j, n: (j, n, 0, 0)),
            # ground-plane bias (f32)
            pl.BlockSpec((pl.Squeezed(), pl.Squeezed(), 1, tile_p),
                         lambda j, n: (j, n, 0, 0)),
        ],
        out_specs=[
            # depth / opacity accumulate in place; index_map ignores n so the
            # block stays VMEM-resident across the whole depth sweep.
            pl.BlockSpec((B, tile_p), lambda j, n: (0, j)),
            pl.BlockSpec((B, tile_p), lambda j, n: (0, j)),
        ],
        scratch_shapes=[pltpu.VMEM((B, tile_p), jnp.float32)],   # transmittance
    )

    # VMEM budget (double-buffered blocks) with headroom, kept under v7x's 64 MiB
    # physical and above v5e's 16 MiB scoped default when needed.
    vmem_est = (2 * K * tile_p * weight_bytes          # M
                + 2 * tile_p * 4                        # bias
                + 2 * B * K * weight_bytes              # voxel
                + 2 * 2 * B * tile_p * 4                # depth + opacity blocks
                + B * tile_p * 4)                       # transmittance scratch
    vmem_limit = int(min(max(2 * vmem_est + (2 << 20), 16 << 20), 56 << 20))

    cost = pl.CostEstimate(
        flops=2 * B * K * P * N,
        transcendentals=B * P * N,
        bytes_accessed=(N * K * P * weight_bytes + N * P * 4
                        + B * K * weight_bytes + 2 * B * P * 4),
    )

    call = pl.pallas_call(
        kernel,
        out_shape=(jax.ShapeDtypeStruct((B, P), jnp.float32),
                   jax.ShapeDtypeStruct((B, P), jnp.float32)),
        grid_spec=grid_spec,
        compiler_params=pltpu.CompilerParams(
            dimension_semantics=("parallel", "arbitrary"),
            vmem_limit_bytes=vmem_limit),
        cost_estimate=cost,
    )

    def forward(voxel):
        vox = jnp.asarray(voxel, jnp.float32).reshape(B, K).astype(weight_dtype)
        depth_flat, opac_flat = call(vox, M_dev, b_dev)
        depth = depth_flat.reshape(B, 1, H, W)
        opacity = opac_flat.reshape(B, 1, H, W)
        dmin = jnp.min(depth)
        dmax = jnp.max(depth)
        depth = (depth - dmin) / (dmax - dmin)            # global min-max norm
        return depth, opacity

    # expose the exact device-side operator for matched-precision testing
    forward.m_host = M_host
    forward.bias_host = b_host
    forward.tile_p = tile_p
    forward.intv = intv
    return forward


# ---------------------------------------------------------------------------
# pure-numpy references
# ---------------------------------------------------------------------------
def _volume_render(sigma_delta, intv, B, H, W, N):
    """sigma_delta: (B, N, P), already multiplied by intv (mirrors the module)."""
    alpha = 1.0 - np.exp(-sigma_delta)
    T = np.exp(-(np.cumsum(sigma_delta, axis=1) - sigma_delta))   # exclusive
    prob = T * alpha
    dvals = (np.arange(1, N + 1, dtype=np.float64) * intv)[None, :, None]
    depth = (dvals * prob).sum(axis=1)
    opac = prob.sum(axis=1)
    depth = (depth - depth.min()) / (depth.max() - depth.min())
    return (depth.reshape(B, 1, H, W).astype(np.float32),
            opac.reshape(B, 1, H, W).astype(np.float32))


def _exact_reference(voxel_np, H, W, N, camera_height, max_height, plane_scale,
                     total_sample_len, use_ground=True):
    """f64 mirror of the PyTorch forward (grid_sample emulated with the taps)."""
    B, C, Hd, Wd = voxel_np.shape
    vol = voxel_np.astype(np.float64)
    if use_ground:
        vol = np.concatenate([np.full((B, 1, Hd, Wd), 1000.0), vol], axis=1)
    D = vol.shape[1]
    corners = _pano_grid_taps(H, W, N, D, Hd, Wd,
                              camera_height, max_height, plane_scale)
    samp = np.zeros((B, N, H, W))
    for zi, yi, xi, w in corners:
        samp += w[None] * vol[:, zi, yi, xi]
    intv = total_sample_len / N
    return _volume_render((samp * intv).reshape(B, N, H * W), intv, B, H, W, N)


def _matched_reference(voxel_np, m_host, bias_host, H, W, intv):
    """f64 reference that uses the *same* bf16 operator / bf16 voxel the kernel
    uses, isolating the Pallas tiling/pipeline from the (intentional) bf16
    quantization of the trilinear weights."""
    n_tiles, N, K, tile_p = m_host.shape
    P = n_tiles * tile_p
    B = voxel_np.shape[0]
    M = np.asarray(m_host, dtype=np.float64).transpose(1, 2, 0, 3).reshape(N, K, P)
    bias = np.asarray(bias_host, dtype=np.float64).transpose(1, 2, 0, 3).reshape(N, P)
    vox_q = np.asarray(voxel_np.reshape(B, K).astype(jnp.bfloat16),
                       dtype=np.float64)
    sigma = np.einsum('bk,nkp->bnp', vox_q, M) + bias[None]
    return _volume_render(sigma, intv, B, H, W, N)


if __name__ == "__main__":
    # small, forward-consistent shapes
    B, C, Hd, Wd = 2, 4, 16, 16        # voxel: (B, C, Hd, Wd)
    H, W = 16, 32                      # pano output plane (H != W on purpose)
    N = 8                              # total_sample_num
    camera_height, max_height, plane_scale = 2.0, 8.0, 16.0
    total_sample_len = 8.0

    key = jax.random.PRNGKey(0)
    voxel = jax.random.uniform(key, (B, C, Hd, Wd), dtype=jnp.float32)

    renderer = make_pano_renderer(
        B, H, W, C, Hd, Wd,
        camera_height=camera_height, max_height=max_height,
        plane_scale=plane_scale, total_sample_len=total_sample_len,
        total_sample_num=N, use_ground=True)

    depth, opacity = renderer(voxel)
    depth = jax.block_until_ready(depth)
    opacity = jax.block_until_ready(opacity)

    vox_np = np.asarray(voxel)

    # (1) matched-precision reference (same bf16 operator & voxel): tight check
    #     of the Pallas tiling / accumulation / rendering recurrence.
    q_depth, q_opac = _matched_reference(vox_np, renderer.m_host,
                                         renderer.bias_host, H, W, renderer.intv)
    np.testing.assert_allclose(np.asarray(depth), q_depth, rtol=1e-4, atol=1e-4)
    np.testing.assert_allclose(np.asarray(opacity), q_opac, rtol=1e-4, atol=1e-4)

    # (2) exact f64 reference (mirrors the PyTorch forward): bounds the
    #     intentional bf16 quantization of the trilinear weights.
    ref_depth, ref_opac = _exact_reference(
        vox_np, H, W, N, camera_height, max_height, plane_scale,
        total_sample_len, use_ground=True)
    np.testing.assert_allclose(np.asarray(depth), ref_depth, rtol=0.0, atol=5e-2)
    np.testing.assert_allclose(np.asarray(opacity), ref_opac, rtol=0.0, atol=5e-2)

    print("KERNEL_OK")
</pallas_src>

<mosaic_0001>
module attributes {stable_mosaic.version = 11 : i64} {
  func.func @kernel(%arg0: i32, %arg1: i32, %arg2: memref<2x1024xbf16, #tpu.memory_space<vmem>>, %arg3: memref<1x1x1024x128xbf16, #tpu.memory_space<vmem>>, %arg4: memref<1x1x1x128xf32, #tpu.memory_space<vmem>>, %arg5: memref<2x128xf32, #tpu.memory_space<vmem>>, %arg6: memref<2x128xf32, #tpu.memory_space<vmem>>, %arg7: memref<2x128xf32, #tpu.memory_space<vmem>>) attributes {dimension_semantics = [#tpu.dimension_semantics<parallel>, #tpu.dimension_semantics<arbitrary>], iteration_bounds = array<i64: 4, 8>, scalar_prefetch = 0 : i64, scratch_operands = 1 : i64, tpu.core_type = #tpu.core_type<tc>, window_params = [{pipeline_mode = #tpu.pipeline_mode<synchronous>, transform_indices = @transform_0, window_bounds = array<i64: 2, 1024>}, {transform_indices = @transform_1, window_bounds = array<i64: 1, 1, 1024, 128>}, {transform_indices = @transform_2, window_bounds = array<i64: 1, 1, 1, 128>}, {transform_indices = @transform_3, window_bounds = array<i64: 2, 128>}, {transform_indices = @transform_4, window_bounds = array<i64: 2, 128>}]} {
    %c0_i32 = arith.constant 0 : i32
    %0 = arith.cmpi eq, %arg1, %c0_i32 : i32
    %1 = arith.extui %0 : i1 to i32
    %c0_i32_0 = arith.constant 0 : i32
    %2 = arith.cmpi ne, %1, %c0_i32_0 : i32
    scf.if %2 {
      %cst_27 = arith.constant 1.000000e+00 : f32
      %32 = vector.broadcast %cst_27 : f32 to vector<2x128xf32>
      %c0_28 = arith.constant 0 : index
      %c0_29 = arith.constant 0 : index
      %33 = vector.load %arg7[%c0_28, %c0_29] : memref<2x128xf32, #tpu.memory_space<vmem>>, vector<2x128xf32>
      tpu.vector_store %arg7[%c0_28, %c0_29], %32 {strides = array<i32>} : memref<2x128xf32, #tpu.memory_space<vmem>>, vector<2x128xf32>,
      %cst_30 = arith.constant 0.000000e+00 : f32
      %34 = vector.broadcast %cst_30 : f32 to vector<2x128xf32>
      %c0_31 = arith.constant 0 : index
      %c0_32 = arith.constant 0 : index
      %35 = vector.load %arg5[%c0_31, %c0_32] : memref<2x128xf32, #tpu.memory_space<vmem>>, vector<2x128xf32>
      tpu.vector_store %arg5[%c0_31, %c0_32], %34 {strides = array<i32>} : memref<2x128xf32, #tpu.memory_space<vmem>>, vector<2x128xf32>,
      %cst_33 = arith.constant 0.000000e+00 : f32
      %36 = vector.broadcast %cst_33 : f32 to vector<2x128xf32>
      %c0_34 = arith.constant 0 : index
      %c0_35 = arith.constant 0 : index
      %37 = vector.load %arg6[%c0_34, %c0_35] : memref<2x128xf32, #tpu.memory_space<vmem>>, vector<2x128xf32>
      tpu.vector_store %arg6[%c0_34, %c0_35], %36 {strides = array<i32>} : memref<2x128xf32, #tpu.memory_space<vmem>>, vector<2x128xf32>,
    } else {
    }
    %c0 = arith.constant 0 : index
    %c0_1 = arith.constant 0 : index
    %3 = vector.load %arg2[%c0, %c0_1] : memref<2x1024xbf16, #tpu.memory_space<vmem>>, vector<2x1024xbf16>
    %c0_2 = arith.constant 0 : index
    %c0_3 = arith.constant 0 : index
    %c0_4 = arith.constant 0 : index
    %c0_5 = arith.constant 0 : index
    %4 = vector.load %arg3[%c0_2, %c0_3, %c0_4, %c0_5] : memref<1x1x1024x128xbf16, #tpu.memory_space<vmem>>, vector<1x1x1024x128xbf16>
    %5 = vector.shape_cast %4 : vector<1x1x1024x128xbf16> to vector<1024x128xbf16>
    %cst = arith.constant dense<0.000000e+00> : vector<2x128xf32>
    %6 = tpu.matmul %3, %5, %cst {dimension_numbers = #tpu.dot_dimension_numbers<[1], [0], [0], [1], [0, 0, 1, 1], [], []>} : vector<2x1024xbf16>, vector<1024x128xbf16>, vector<2x128xf32> -> vector<2x128xf32>
    %c0_6 = arith.constant 0 : index
    %c0_7 = arith.constant 0 : index
    %c0_8 = arith.constant 0 : index
    %c0_9 = arith.constant 0 : index
    %7 = vector.load %arg4[%c0_6, %c0_7, %c0_8, %c0_9] : memref<1x1x1x128xf32, #tpu.memory_space<vmem>>, vector<1x1x1x128xf32>
    %8 = vector.shape_cast %7 : vector<1x1x1x128xf32> to vector<1x128xf32>
    %9 = vector.broadcast %8 : vector<1x128xf32> to vector<2x128xf32>
    %10 = arith.addf %6, %9 : vector<2x128xf32>
    %cst_10 = arith.constant 0.000000e+00 : f32
    %11 = vector.broadcast %cst_10 : f32 to vector<2x128xf32>
    %12 = arith.subf %11, %10 : vector<2x128xf32>
    %13 = math.exp %12 : vector<2x128xf32>
    %c0_11 = arith.constant 0 : index
    %c0_12 = arith.constant 0 : index
    %14 = vector.load %arg7[%c0_11, %c0_12] : memref<2x128xf32, #tpu.memory_space<vmem>>, vector<2x128xf32>
    %cst_13 = arith.constant 1.000000e+00 : f32
    %15 = vector.broadcast %cst_13 : f32 to vector<2x128xf32>
    %16 = arith.subf %15, %13 : vector<2x128xf32>
    %17 = arith.mulf %14, %16 : vector<2x128xf32>
    %c1_i32 = arith.constant 1 : i32
    %18 = arith.addi %arg1, %c1_i32 : i32
    %19 = arith.sitofp %18 : i32 to f32
    %cst_14 = arith.constant 1.000000e+00 : f32
    %20 = arith.mulf %19, %cst_14 : f32
    %c0_15 = arith.constant 0 : index
    %c0_16 = arith.constant 0 : index
    %21 = vector.load %arg5[%c0_15, %c0_16] : memref<2x128xf32, #tpu.memory_space<vmem>>, vector<2x128xf32>
    %22 = vector.broadcast %20 : f32 to vector<2x128xf32>
    %23 = arith.mulf %22, %17 : vector<2x128xf32>
    %24 = arith.addf %21, %23 : vector<2x128xf32>
    %c0_17 = arith.constant 0 : index
    %c0_18 = arith.constant 0 : index
    %25 = vector.load %arg5[%c0_17, %c0_18] : memref<2x128xf32, #tpu.memory_space<vmem>>, vector<2x128xf32>
    tpu.vector_store %arg5[%c0_17, %c0_18], %24 {strides = array<i32>} : memref<2x128xf32, #tpu.memory_space<vmem>>, vector<2x128xf32>,
    %c0_19 = arith.constant 0 : index
    %c0_20 = arith.constant 0 : index
    %26 = vector.load %arg6[%c0_19, %c0_20] : memref<2x128xf32, #tpu.memory_space<vmem>>, vector<2x128xf32>
    %27 = arith.addf %26, %17 : vector<2x128xf32>
    %c0_21 = arith.constant 0 : index
    %c0_22 = arith.constant 0 : index
    %28 = vector.load %arg6[%c0_21, %c0_22] : memref<2x128xf32, #tpu.memory_space<vmem>>, vector<2x128xf32>
    tpu.vector_store %arg6[%c0_21, %c0_22], %27 {strides = array<i32>} : memref<2x128xf32, #tpu.memory_space<vmem>>, vector<2x128xf32>,
    %c0_23 = arith.constant 0 : index
    %c0_24 = arith.constant 0 : index
    %29 = vector.load %arg7[%c0_23, %c0_24] : memref<2x128xf32, #tpu.memory_space<vmem>>, vector<2x128xf32>
    %30 = arith.mulf %29, %13 : vector<2x128xf32>
    %c0_25 = arith.constant 0 : index
    %c0_26 = arith.constant 0 : index
    %31 = vector.load %arg7[%c0_25, %c0_26] : memref<2x128xf32, #tpu.memory_space<vmem>>, vector<2x128xf32>
    tpu.vector_store %arg7[%c0_25, %c0_26], %30 {strides = array<i32>} : memref<2x128xf32, #tpu.memory_space<vmem>>, vector<2x128xf32>,
    return
  }
  func.func @transform_0(%arg0: i32, %arg1: i32) -> (i32, i32) {
    %c0_i32 = arith.constant 0 : i32
    %c0_i32_0 = arith.constant 0 : i32
    %c0_i32_1 = arith.constant 0 : i32
    return %c0_i32, %c0_i32_0 : i32, i32
  }
  func.func @transform_1(%arg0: i32, %arg1: i32) -> (i32, i32, i32, i32) {
    %c0_i32 = arith.constant 0 : i32
    %c0_i32_0 = arith.constant 0 : i32
    %c0_i32_1 = arith.constant 0 : i32
    return %arg0, %arg1, %c0_i32, %c0_i32_0 : i32, i32, i32, i32
  }
  func.func @transform_2(%arg0: i32, %arg1: i32) -> (i32, i32, i32, i32) {
    %c0_i32 = arith.constant 0 : i32
    %c0_i32_0 = arith.constant 0 : i32
    %c0_i32_1 = arith.constant 0 : i32
    return %arg0, %arg1, %c0_i32, %c0_i32_0 : i32, i32, i32, i32
  }
  func.func @transform_3(%arg0: i32, %arg1: i32) -> (i32, i32) {
    %c0_i32 = arith.constant 0 : i32
    %c0_i32_0 = arith.constant 0 : i32
    return %c0_i32, %arg0 : i32, i32
  }
  func.func @transform_4(%arg0: i32, %arg1: i32) -> (i32, i32) {
    %c0_i32 = arith.constant 0 : i32
    %c0_i32_0 = arith.constant 0 : i32
    return %c0_i32, %arg0 : i32, i32
  }
}

</mosaic_0001>

<llo_original>
// kernel: tpu_custom_call.1
$region0: #{tpu_custom_call.1}
  #allocation0 [shape = 'u32[]', space=smem, size = 0x4, offset = 0x4, fixed_abs, tag = 'smem constant byte address 0x4 - core index']
  #allocation1 [shape = 'u32[144,128]{1,0:T(1,128)}', space=vmem, size = 0x12000, scoped, tag = 'internal scratch']
  #allocation2 [shape = 'f32[2,128]{1,0:T(2,128)}', space=vmem, size = 0x400, scoped, tag = 'scratch operand']
  %s0 = inlined_call_operand.hbm [shape: bf16[2,1024], index: 0, kind: input, shape index: {}]
  %s1 = inlined_call_operand.hbm [shape: bf16[4,8,1024,128], index: 1, kind: input, shape index: {}]
  %s2 = inlined_call_operand.hbm [shape: f32[4,8,1,128], index: 2, kind: input, shape index: {}]
  %s3 = inlined_call_operand.hbm [shape: f32[2,512], index: 3, kind: output, shape index: {0}]
  %s4 = inlined_call_operand.hbm [shape: f32[2,512], index: 4, kind: output, shape index: {1}]
  %5 = xla_tuple %s3, %s4
  %s6 = sld [smem:[#allocation0]]
  $region69: #{tpu_custom_call.1} parent=0
    _
  %s8 = ssub.s32 1, %s6
  %s9 = scalar_select 0, %s8, %s6
  $region1: #{tpu_custom_call.1} parent=0
    #allocation3 [shape = 'u8[4096]{0}', space=vmem, size = 0x1000, scoped, tag = 'input window, operand 0, single buffered']
    #allocation4 [shape = 's32[2]{0}', space=sflag, size = 0x8, scoped, tag = 'scoped memory for tpu_custom_call.1']
    #allocation5 [shape = 's32[2]{0}', space=sflag, size = 0x8, scoped, tag = 'scoped memory for tpu_custom_call.1']
    #allocation6 [shape = 'u8[524288]{0}', space=vmem, size = 0x80000, scoped, tag = 'input window, operand 1']
    #allocation7 [shape = 's32[2]{0}', space=sflag, size = 0x8, scoped, tag = 'scoped memory for tpu_custom_call.1']
    #allocation8 [shape = 'u8[1024]{0}', space=vmem, size = 0x400, scoped, tag = 'input window, operand 2']
    #allocation9 [shape = 'u8[2048]{0}', space=vmem, size = 0x800, scoped, tag = 'output window, operand 0']
    #allocation10 [shape = 'u8[2048]{0}', space=vmem, size = 0x800, scoped, tag = 'output window, operand 1']
    #allocation11 [shape = 's32[2]{0}', space=sflag, size = 0x8, scoped, tag = 'scoped memory for tpu_custom_call.1']
    %10 = vsyncpa [#allocation4], 0
    %11 = vsyncpa [#allocation7], 0
    %s12 = scalar_lea.sflag [#allocation7], 1
    %13 = vsyncpa %s12, 0
    %14 = vsyncpa [#allocation5], 0
    %s15 = scalar_lea.sflag [#allocation5], 1
    %16 = vsyncpa %s15, 0
    %17 = vsyncpa [#allocation11], 0
    %s18 = scalar_lea.sflag [#allocation11], 1
    %19 = vsyncpa %s18, 0
    loop: start=0, step=1, limit=34
    $region2: #{tpu_custom_call.1} parent=1 // loop_pre_header
      _
    $region3: #{tpu_custom_call.1} parent=1 // loop_header
      %s21 = sphi 0, %s25
      %p22 = scmp.ge.s32.totalorder %s21, 34
      %s28 = sphi 0, %s40
      %s29 = sphi 0, %s36
      %s30 = sphi 0, %s28
      %s31 = sphi 0, %s29
      %s32 = sphi 0, %s30
      %s33 = sphi 0, %s31
      %s41 = sphi 0, %s41
      %s43 = sphi 0, %s41
      %s44 = sphi 0, %s43
      %s58 = sphi 0, %s44
      %s66 = sphi 0, %s68
      %s69 = sphi 0, %s66
      %s70 = sphi 0, %s69
      %s86 = sphi 0, %s70
      %s94 = sphi 0, %s96
      %s97 = sphi 0, %s94
      %s98 = sphi 0, %s97
      %s114 = sphi 0, %s98
      %s120 = sphi 0, %s122
      %s123 = sphi 0, %s120
      %s124 = sphi 0, %s123
      %s140 = sphi 0, %s124
      %s146 = sphi 0, %s148
      %s149 = sphi 0, %s146
      %s150 = sphi 0, %s149
      %s166 = sphi 0, %s150
    $region4: #{tpu_custom_call.1} parent=1 // loop_header_branch
      %24 = sbr.rel (%p22) target = $region8
    $region5: #{tpu_custom_call.1} parent=1 // loop_body
      %s26 = ssub.s32 %s21, 1
      %s27 = ssub.s32 %s21, 2
      %s34 = sadd.s32 1, %s29
      %p35 = scmp.ge.s32.totalorder %s34, 8
      %s36 = scalar_select %p35, 0, %s34
      %s37 = sadd.s32 1, %s28
      %s38 = scalar_select %p35, %s37, %s28
      %p39 = scmp.ge.s32.totalorder %s38, 4
      %s40 = scalar_select %p39, 0, %s38
      %s42 = sadd.s32 %s41, 1
      %p45 = scmp.eq.s32.totalorder %s21, 31
      %p46 = scmp.ne.s32.totalorder %s41, %s43
      %p47 = scmp.eq.s32.totalorder %s21, 0
      %p48 = por %p46, %p47
      %p49 = scmp.ne.s32.totalorder %s41, %s43
      %p50 = scmp.eq.s32.totalorder %s26, 31
      %p51 = por %p49, %p50
      %p52 = scmp.ne.s32.totalorder %s43, %s44
      %p53 = scmp.eq.s32.totalorder %s26, 0
      %p54 = por %p52, %p53
      %p55 = scmp.ne.s32.totalorder %s43, %s44
      %p56 = scmp.eq.s32.totalorder %s27, 31
      %p57 = por %p55, %p56
      %p59 = scmp.ne.s32.totalorder %s44, %s58
      %p60 = scmp.eq.s32.totalorder %s27, 0
      %p61 = por %p59, %p60
      %s62 = ssub.s32 %s28, %s40
      %s63 = ssub.s32 %s29, %s36
      %s64 = sor.u32 %s62, %s63
      %p65 = scmp.eq.s32.totalorder %s64, 0
      %s67 = sadd.s32 %s66, 1
      %s68 = scalar_select %p65, %s66, %s67
      %p71 = pneg %p65
      %p72 = scmp.eq.s32.totalorder %s21, 31
      %p73 = por %p71, %p72
      %p74 = scmp.ne.s32.totalorder %s66, %s69
      %p75 = scmp.eq.s32.totalorder %s21, 0
      %p76 = por %p74, %p75
      %p77 = scmp.ne.s32.totalorder %s66, %s69
      %p78 = scmp.eq.s32.totalorder %s26, 31
      %p79 = por %p77, %p78
      %p80 = scmp.ne.s32.totalorder %s69, %s70
      %p81 = scmp.eq.s32.totalorder %s26, 0
      %p82 = por %p80, %p81
      %p83 = scmp.ne.s32.totalorder %s69, %s70
      %p84 = scmp.eq.s32.totalorder %s27, 31
      %p85 = por %p83, %p84
      %p87 = scmp.ne.s32.totalorder %s70, %s86
      %p88 = scmp.eq.s32.totalorder %s27, 0
      %p89 = por %p87, %p88
      %s90 = ssub.s32 %s28, %s40
      %s91 = ssub.s32 %s29, %s36
      %s92 = sor.u32 %s90, %s91
      %p93 = scmp.eq.s32.totalorder %s92, 0
      %s95 = sadd.s32 %s94, 1
      %s96 = scalar_select %p93, %s94, %s95
      %p99 = pneg %p93
      %p100 = scmp.eq.s32.totalorder %s21, 31
      %p101 = por %p99, %p100
      %p102 = scmp.ne.s32.totalorder %s94, %s97
      %p103 = scmp.eq.s32.totalorder %s21, 0
      %p104 = por %p102, %p103
      %p105 = scmp.ne.s32.totalorder %s94, %s97
      %p106 = scmp.eq.s32.totalorder %s26, 31
      %p107 = por %p105, %p106
      %p108 = scmp.ne.s32.totalorder %s97, %s98
      %p109 = scmp.eq.s32.totalorder %s26, 0
      %p110 = por %p108, %p109
      %p111 = scmp.ne.s32.totalorder %s97, %s98
      %p112 = scmp.eq.s32.totalorder %s27, 31
      %p113 = por %p111, %p112
      %p115 = scmp.ne.s32.totalorder %s98, %s114
      %p116 = scmp.eq.s32.totalorder %s27, 0
      %p117 = por %p115, %p116
      %s118 = ssub.s32 %s28, %s40
      %p119 = scmp.eq.s32.totalorder %s118, 0
      %s121 = sadd.s32 %s120, 1
      %s122 = scalar_select %p119, %s120, %s121
      %p125 = pneg %p119
      %p126 = scmp.eq.s32.totalorder %s21, 31
      %p127 = por %p125, %p126
      %p128 = scmp.ne.s32.totalorder %s120, %s123
      %p129 = scmp.eq.s32.totalorder %s21, 0
      %p130 = por %p128, %p129
      %p131 = scmp.ne.s32.totalorder %s120, %s123
      %p132 = scmp.eq.s32.totalorder %s26, 31
      %p133 = por %p131, %p132
      %p134 = scmp.ne.s32.totalorder %s123, %s124
      %p135 = scmp.eq.s32.totalorder %s26, 0
      %p136 = por %p134, %p135
      %p137 = scmp.ne.s32.totalorder %s123, %s124
      %p138 = scmp.eq.s32.totalorder %s27, 31
      %p139 = por %p137, %p138
      %p141 = scmp.ne.s32.totalorder %s124, %s140
      %p142 = scmp.eq.s32.totalorder %s27, 0
      %p143 = por %p141, %p142
      %s144 = ssub.s32 %s28, %s40
      %p145 = scmp.eq.s32.totalorder %s144, 0
      %s147 = sadd.s32 %s146, 1
      %s148 = scalar_select %p145, %s146, %s147
      %p151 = pneg %p145
      %p152 = scmp.eq.s32.totalorder %s21, 31
      %p153 = por %p151, %p152
      %p154 = scmp.ne.s32.totalorder %s146, %s149
      %p155 = scmp.eq.s32.totalorder %s21, 0
      %p156 = por %p154, %p155
      %p157 = scmp.ne.s32.totalorder %s146, %s149
      %p158 = scmp.eq.s32.totalorder %s26, 31
      %p159 = por %p157, %p158
      %p160 = scmp.ne.s32.totalorder %s149, %s150
      %p161 = scmp.eq.s32.totalorder %s26, 0
      %p162 = por %p160, %p161
      %p163 = scmp.ne.s32.totalorder %s149, %s150
      %p164 = scmp.eq.s32.totalorder %s27, 31
      %p165 = por %p163, %p164
      %p167 = scmp.ne.s32.totalorder %s150, %s166
      %p168 = scmp.eq.s32.totalorder %s27, 0
      %p169 = por %p167, %p168
      %p170 = scmp.le.s32.totalorder 1, %s21
      %p171 = scmp.lt.s32.totalorder %s21, 33
      %p172 = pnand %p170, %p171
      %p173 = pneg %p172
      // Predicated region
      $region9: #{tpu_custom_call.1} parent=5 // pred_check
        _
      $region10: #{tpu_custom_call.1} parent=5 // pred_check_branch
        %175 = sbr.rel (%p172) target = $region12
      $region11: #{tpu_custom_call.1} parent=5 // pred_region
        %s176 = ssub.s32 %s21, 1
        // Predicated region
        $region13: #{tpu_custom_call.1} parent=11 // pred_check
          %p177 = pneg %p54
        $region14: #{tpu_custom_call.1} parent=11 // pred_check_branch
          %179 = sbr.rel (%p177) target = $region16
        $region15: #{tpu_custom_call.1} parent=11 // pred_region
          %s181 = ssub.s32 128, 128
          %182 = vsyncadd [#allocation4], %s181
          %s184 = sshll.u32 [#allocation3], 4
          %s185 = int_to_ptr.vmem [resolvable:$true] %s184
          %187 = dma.hbm_to_vmem [thread:$0]  %s0, 128, %s185, [#allocation4]
        $region16: #{tpu_custom_call.1} parent=11 // pred_fallthru
          _
      $region12: #{tpu_custom_call.1} parent=5 // pred_fallthru
        _
      %p188 = scmp.lt.s32.totalorder %s21, 32
      // Predicated region
      $region17: #{tpu_custom_call.1} parent=5 // pred_check
        %p189 = pneg %p188
      $region18: #{tpu_custom_call.1} parent=5 // pred_check_branch
        %191 = sbr.rel (%p189) target = $region20
      $region19: #{tpu_custom_call.1} parent=5 // pred_region
        // Predicated region
        $region21: #{tpu_custom_call.1} parent=19 // pred_check
          %p192 = pneg %p76
        $region22: #{tpu_custom_call.1} parent=19 // pred_check_branch
          %194 = sbr.rel (%p192) target = $region24
        $region23: #{tpu_custom_call.1} parent=19 // pred_region
          %s195 = sand.u32 %s21, 1
          %s196 = scalar_lea.sflag [#allocation7], %s195
          %s197 = sand.u32 %s66, 1
          %s198 = smul.addr %s197, 512
          %s199 = scalar_lea.vmem [#allocation6], %s198
          %s201 = ssub.s32 8192, 8192
          %202 = vsyncadd %s196, %s201
          %s203 = smul.addr %s29, 128
          %s204 = smul.addr %s28, 1024
          %s205 = sadd.s32 %s203, %s204
          %s206 = smul.addr %s205, 64
          %s207 = scalar_lea.hbm %s1, %s206
          %s208 = sshll.u32 %s199, 4
          %s209 = int_to_ptr.vmem [resolvable:$true] %s208
          %214 = dma.hbm_to_vmem [thread:$0]  %s207, 8192, %s209, %s196, 64, 64, 4
        $region24: #{tpu_custom_call.1} parent=19 // pred_fallthru
          _
        // Predicated region
        $region25: #{tpu_custom_call.1} parent=19 // pred_check
          %p215 = pneg %p104
        $region26: #{tpu_custom_call.1} parent=19 // pred_check_branch
          %217 = sbr.rel (%p215) target = $region28
        $region27: #{tpu_custom_call.1} parent=19 // pred_region
          %s218 = sand.u32 %s21, 1
          %s219 = scalar_lea.sflag [#allocation7], %s218
          %s220 = sand.u32 %s94, 1
          %s221 = scalar_lea.vmem [#allocation8], %s220
          %s223 = ssub.s32 16, 16
          %224 = vsyncadd %s219, %s223
          %s225 = smul.addr %s28, 8
          %s226 = sadd.s32 %s29, %s225
          %s227 = smul.addr %s226, 16
          %s228 = scalar_lea.hbm %s2, %s227
          %s230 = sshll.u32 %s221, 4
          %s231 = int_to_ptr.vmem [resolvable:$true] %s230
          %233 = dma.hbm_to_vmem [thread:$0]  %s228, 16, %s231, %s219
        $region28: #{tpu_custom_call.1} parent=19 // pred_fallthru
          _
      $region20: #{tpu_custom_call.1} parent=5 // pred_fallthru
        _
      %p234 = scmp.le.s32.totalorder 1, %s21
      %p235 = scmp.lt.s32.totalorder %s21, 33
      %p236 = pnand %p234, %p235
      %p237 = pneg %p236
      // Predicated region
      $region29: #{tpu_custom_call.1} parent=5 // pred_check
        _
      $region30: #{tpu_custom_call.1} parent=5 // pred_check_branch
        %239 = sbr.rel (%p236) target = $region32
      $region31: #{tpu_custom_call.1} parent=5 // pred_region
        %s240 = ssub.s32 %s21, 1
        // Predicated region
        $region33: #{tpu_custom_call.1} parent=31 // pred_check
          %p241 = pneg %p54
        $region34: #{tpu_custom_call.1} parent=31 // pred_check_branch
          %243 = sbr.rel (%p241) target = $region36
        $region35: #{tpu_custom_call.1} parent=31 // pred_region
          %244 = dma.done [#allocation4], 128
        $region36: #{tpu_custom_call.1} parent=31 // pred_fallthru
          _
        %s245 = sand.u32 %s26, 1
        %s246 = scalar_lea.sflag [#allocation7], %s245
        %s247 = sand.u32 %s69, 1
        %s248 = smul.addr %s247, 512
        %s249 = scalar_lea.vmem [#allocation6], %s248
        // Predicated region
        $region37: #{tpu_custom_call.1} parent=31 // pred_check
          %p250 = pneg %p82
        $region38: #{tpu_custom_call.1} parent=31 // pred_check_branch
          %252 = sbr.rel (%p250) target = $region40
        $region39: #{tpu_custom_call.1} parent=31 // pred_region
          %253 = dma.done %s246, 8192
        $region40: #{tpu_custom_call.1} parent=31 // pred_fallthru
          _
        %s254 = sand.u32 %s26, 1
        %s255 = scalar_lea.sflag [#allocation7], %s254
        %s256 = sand.u32 %s97, 1
        %s257 = scalar_lea.vmem [#allocation8], %s256
        // Predicated region
        $region41: #{tpu_custom_call.1} parent=31 // pred_check
          %p258 = pneg %p110
        $region42: #{tpu_custom_call.1} parent=31 // pred_check_branch
          %260 = sbr.rel (%p258) target = $region44
        $region43: #{tpu_custom_call.1} parent=31 // pred_region
          %261 = dma.done %s255, 16
        $region44: #{tpu_custom_call.1} parent=31 // pred_fallthru
          _
        %p262 = pneg %p54
        %p263 = pneg %p51
        %s264 = sand.u32 %s26, 1
        %s265 = scalar_lea.sflag [#allocation7], %s264
        %s266 = sand.u32 %s69, 1
        %s267 = smul.addr %s266, 512
        %s268 = scalar_lea.vmem [#allocation6], %s267
        %p269 = pneg %p82
        %p270 = pneg %p79
        %s271 = sand.u32 %s26, 1
        %s272 = scalar_lea.sflag [#allocation7], %s271
        %s273 = sand.u32 %s97, 1
        %s274 = scalar_lea.vmem [#allocation8], %s273
        %p275 = pneg %p110
        %p276 = pneg %p107
        %p277 = pneg %p136
        %p278 = pneg %p133
        %s279 = sand.u32 %s123, 1
        %s280 = scalar_lea.sflag [#allocation5], %s279
        %s281 = sand.u32 %s123, 1
        %s282 = smul.addr %s281, 2
        %s283 = scalar_lea.vmem [#allocation9], %s282
        %p284 = pneg %p162
        %p285 = pneg %p159
        %s286 = sand.u32 %s149, 1
        %s287 = scalar_lea.sflag [#allocation11], %s286
        %s288 = sand.u32 %s149, 1
        %s289 = smul.addr %s288, 2
        %s290 = scalar_lea.vmem [#allocation10], %s289
        %p292 = scmp.eq.s32.totalorder %s31, 0
        // Predicated region
        $region45: #{tpu_custom_call.1} parent=31 // pred_check
          %p293 = pneg %p292
        $region46: #{tpu_custom_call.1} parent=31 // pred_check_branch
          %295 = sbr.rel (%p293) target = $region48
        $region47: #{tpu_custom_call.1} parent=31 // pred_region
          %296 = vst [vmem:[#allocation2] sm:$0x3] 1.0
          %297 = vst [vmem:[%s283] sm:$0x3] 0.0
          %298 = vst [vmem:[%s290] sm:$0x3] 0.0
        $region48: #{tpu_custom_call.1} parent=31 // pred_fallthru
          _
        %v299 = vld [vmem:[#allocation3] sm:$0xff]
        %v300 = vld [vmem:[%s249] sm:$0xf]
        %v301 = vld [vmem:[%s249 + $0x4] sm:$0xf]
        %v302 = vld [vmem:[%s249 + $0x8] sm:$0xf]
        %v303 = vld [vmem:[%s249 + $0xc] sm:$0xf]
        %v304 = vld [vmem:[%s249 + $0x10] sm:$0xf]
        %v305 = vld [vmem:[%s249 + $0x14] sm:$0xf]
        %v306 = vld [vmem:[%s249 + $0x18] sm:$0xf]
        %v307 = vld [vmem:[%s249 + $0x1c] sm:$0xf]
        %v308 = vld [vmem:[%s249 + $0x20] sm:$0xf]
        %v309 = vld [vmem:[%s249 + $0x24] sm:$0xf]
        %v310 = vld [vmem:[%s249 + $0x28] sm:$0xf]
        %v311 = vld [vmem:[%s249 + $0x2c] sm:$0xf]
        %v312 = vld [vmem:[%s249 + $0x30] sm:$0xf]
        %v313 = vld [vmem:[%s249 + $0x34] sm:$0xf]
        %v314 = vld [vmem:[%s249 + $0x38] sm:$0xf]
        %v315 = vld [vmem:[%s249 + $0x3c] sm:$0xf]
        %v316 = vld [vmem:[%s249 + $0x40] sm:$0xf]
        %v317 = vld [vmem:[%s249 + $0x44] sm:$0xf]
        %v318 = vld [vmem:[%s249 + $0x48] sm:$0xf]
        %v319 = vld [vmem:[%s249 + $0x4c] sm:$0xf]
        %v320 = vld [vmem:[%s249 + $0x50] sm:$0xf]
        %v321 = vld [vmem:[%s249 + $0x54] sm:$0xf]
        %v322 = vld [vmem:[%s249 + $0x58] sm:$0xf]
        %v323 = vld [vmem:[%s249 + $0x5c] sm:$0xf]
        %v324 = vld [vmem:[%s249 + $0x60] sm:$0xf]
        %v325 = vld [vmem:[%s249 + $0x64] sm:$0xf]
        %v326 = vld [vmem:[%s249 + $0x68] sm:$0xf]
        %v327 = vld [vmem:[%s249 + $0x6c] sm:$0xf]
        %v328 = vld [vmem:[%s249 + $0x70] sm:$0xf]
        %v329 = vld [vmem:[%s249 + $0x74] sm:$0xf]
        %v330 = vld [vmem:[%s249 + $0x78] sm:$0xf]
        %v331 = vld [vmem:[%s249 + $0x7c] sm:$0xf]
        %v332 = vld [vmem:[%s249 + $0x80] sm:$0xf]
        %v333 = vld [vmem:[%s249 + $0x84] sm:$0xf]
        %v334 = vld [vmem:[%s249 + $0x88] sm:$0xf]
        %v335 = vld [vmem:[%s249 + $0x8c] sm:$0xf]
        %v336 = vld [vmem:[%s249 + $0x90] sm:$0xf]
        %v337 = vld [vmem:[%s249 + $0x94] sm:$0xf]
        %v338 = vld [vmem:[%s249 + $0x98] sm:$0xf]
        %v339 = vld [vmem:[%s249 + $0x9c] sm:$0xf]
        %v340 = vld [vmem:[%s249 + $0xa0] sm:$0xf]
        %v341 = vld [vmem:[%s249 + $0xa4] sm:$0xf]
        %v342 = vld [vmem:[%s249 + $0xa8] sm:$0xf]
        %v343 = vld [vmem:[%s249 + $0xac] sm:$0xf]
        %v344 = vld [vmem:[%s249 + $0xb0] sm:$0xf]
        %v345 = vld [vmem:[%s249 + $0xb4] sm:$0xf]
        %v346 = vld [vmem:[%s249 + $0xb8] sm:$0xf]
        %v347 = vld [vmem:[%s249 + $0xbc] sm:$0xf]
        %v348 = vld [vmem:[%s249 + $0xc0] sm:$0xf]
        %v349 = vld [vmem:[%s249 + $0xc4] sm:$0xf]
        %v350 = vld [vmem:[%s249 + $0xc8] sm:$0xf]
        %v351 = vld [vmem:[%s249 + $0xcc] sm:$0xf]
        %v352 = vld [vmem:[%s249 + $0xd0] sm:$0xf]
        %v353 = vld [vmem:[%s249 + $0xd4] sm:$0xf]
        %v354 = vld [vmem:[%s249 + $0xd8] sm:$0xf]
        %v355 = vld [vmem:[%s249 + $0xdc] sm:$0xf]
        %v356 = vld [vmem:[%s249 + $0xe0] sm:$0xf]
        %v357 = vld [vmem:[%s249 + $0xe4] sm:$0xf]
        %v358 = vld [vmem:[%s249 + $0xe8] sm:$0xf]
        %v359 = vld [vmem:[%s249 + $0xec] sm:$0xf]
        %v360 = vld [vmem:[%s249 + $0xf0] sm:$0xf]
        %v361 = vld [vmem:[%s249 + $0xf4] sm:$0xf]
        %v362 = vld [vmem:[%s249 + $0xf8] sm:$0xf]
        %v363 = vld [vmem:[%s249 + $0xfc] sm:$0xf]
        %v364 = vld [vmem:[%s249 + $0x100] sm:$0xf]
        %v365 = vld [vmem:[%s249 + $0x104] sm:$0xf]
        %v366 = vld [vmem:[%s249 + $0x108] sm:$0xf]
        %v367 = vld [vmem:[%s249 + $0x10c] sm:$0xf]
        %v368 = vld [vmem:[%s249 + $0x110] sm:$0xf]
        %v369 = vld [vmem:[%s249 + $0x114] sm:$0xf]
        %v370 = vld [vmem:[%s249 + $0x118] sm:$0xf]
        %v371 = vld [vmem:[%s249 + $0x11c] sm:$0xf]
        %v372 = vld [vmem:[%s249 + $0x120] sm:$0xf]
        %v373 = vld [vmem:[%s249 + $0x124] sm:$0xf]
        %v374 = vld [vmem:[%s249 + $0x128] sm:$0xf]
        %v375 = vld [vmem:[%s249 + $0x12c] sm:$0xf]
        %v376 = vld [vmem:[%s249 + $0x130] sm:$0xf]
        %v377 = vld [vmem:[%s249 + $0x134] sm:$0xf]
        %v378 = vld [vmem:[%s249 + $0x138] sm:$0xf]
        %v379 = vld [vmem:[%s249 + $0x13c] sm:$0xf]
        %v380 = vld [vmem:[%s249 + $0x140] sm:$0xf]
        %v381 = vld [vmem:[%s249 + $0x144] sm:$0xf]
        %v382 = vld [vmem:[%s249 + $0x148] sm:$0xf]
        %v383 = vld [vmem:[%s249 + $0x14c] sm:$0xf]
        %v384 = vld [vmem:[%s249 + $0x150] sm:$0xf]
        %v385 = vld [vmem:[%s249 + $0x154] sm:$0xf]
        %v386 = vld [vmem:[%s249 + $0x158] sm:$0xf]
        %v387 = vld [vmem:[%s249 + $0x15c] sm:$0xf]
        %v388 = vld [vmem:[%s249 + $0x160] sm:$0xf]
        %v389 = vld [vmem:[%s249 + $0x164] sm:$0xf]
        %v390 = vld [vmem:[%s249 + $0x168] sm:$0xf]
        %v391 = vld [vmem:[%s249 + $0x16c] sm:$0xf]
        %v392 = vld [vmem:[%s249 + $0x170] sm:$0xf]
        %v393 = vld [vmem:[%s249 + $0x174] sm:$0xf]
        %v394 = vld [vmem:[%s249 + $0x178] sm:$0xf]
        %v395 = vld [vmem:[%s249 + $0x17c] sm:$0xf]
        %v396 = vld [vmem:[%s249 + $0x180] sm:$0xf]
        %v397 = vld [vmem:[%s249 + $0x184] sm:$0xf]
        %v398 = vld [vmem:[%s249 + $0x188] sm:$0xf]
        %v399 = vld [vmem:[%s249 + $0x18c] sm:$0xf]
        %v400 = vld [vmem:[%s249 + $0x190] sm:$0xf]
        %v401 = vld [vmem:[%s249 + $0x194] sm:$0xf]
        %v402 = vld [vmem:[%s249 + $0x198] sm:$0xf]
        %v403 = vld [vmem:[%s249 + $0x19c] sm:$0xf]
        %v404 = vld [vmem:[%s249 + $0x1a0] sm:$0xf]
        %v405 = vld [vmem:[%s249 + $0x1a4] sm:$0xf]
        %v406 = vld [vmem:[%s249 + $0x1a8] sm:$0xf]
        %v407 = vld [vmem:[%s249 + $0x1ac] sm:$0xf]
        %v408 = vld [vmem:[%s249 + $0x1b0] sm:$0xf]
        %v409 = vld [vmem:[%s249 + $0x1b4] sm:$0xf]
        %v410 = vld [vmem:[%s249 + $0x1b8] sm:$0xf]
        %v411 = vld [vmem:[%s249 + $0x1bc] sm:$0xf]
        %v412 = vld [vmem:[%s249 + $0x1c0] sm:$0xf]
        %v413 = vld [vmem:[%s249 + $0x1c4] sm:$0xf]
        %v414 = vld [vmem:[%s249 + $0x1c8] sm:$0xf]
        %v415 = vld [vmem:[%s249 + $0x1cc] sm:$0xf]
        %v416 = vld [vmem:[%s249 + $0x1d0] sm:$0xf]
        %v417 = vld [vmem:[%s249 + $0x1d4] sm:$0xf]
        %v418 = vld [vmem:[%s249 + $0x1d8] sm:$0xf]
        %v419 = vld [vmem:[%s249 + $0x1dc] sm:$0xf]
        %v420 = vld [vmem:[%s249 + $0x1e0] sm:$0xf]
        %v421 = vld [vmem:[%s249 + $0x1e4] sm:$0xf]
        %v422 = vld [vmem:[%s249 + $0x1e8] sm:$0xf]
        %v423 = vld [vmem:[%s249 + $0x1ec] sm:$0xf]
        %v424 = vld [vmem:[%s249 + $0x1f0] sm:$0xf]
        %v425 = vld [vmem:[%s249 + $0x1f4] sm:$0xf]
        %v426 = vld [vmem:[%s249 + $0x1f8] sm:$0xf]
        %v427 = vld [vmem:[%s249 + $0x1fc] sm:$0xf]
        %v428 = vld [vmem:[%s257] sm:$0x1]
        %v430 = vlaneseq
        %v431 = vshrl.u32 %v430, 7
        %v432 = vsub.s32 0, %v431
        %v433 = vrot.slane %v428, %v432
        %v436 = vcombine.high %v299, %v299
        %v438 = vunpack.c.l.s4 1966171168
        %v439 = vunpack.c.0.s8 %v438
        %v440 = vlaneseq
        %v441 = vshrl.u32 %v440, 7
        %v442 = vsub.s32 %v439, %v441
        %v443 = vrot.slane %v299, %v442
        %v445 = vunpack.c.l.s4 1966171168
        %v446 = vunpack.c.0.s8 %v445
        %v447 = vlaneseq
        %v448 = vshrl.u32 %v447, 7
        %v449 = vsub.s32 %v446, %v448
        %v450 = vrot.slane %v436, %v449
        %v451 = vcombine.high %v443, %v443
        %v452 = vcombine.high %v450, %v450
        %v454 = vunpack.c.l.s4 1966171168
        %v455 = vunpack.c.0.s8 %v454
        %v456 = vlaneseq
        %v457 = vshrl.u32 %v456, 7
        %v458 = vsub.s32 %v455, %v457
        %v459 = vrot.slane %v443, %v458
        %v461 = vunpack.c.l.s4 1966171168
        %v462 = vunpack.c.0.s8 %v461
        %v463 = vlaneseq
        %v464 = vshrl.u32 %v463, 7
        %v465 = vsub.s32 %v462, %v464
        %v466 = vrot.slane %v450, %v465
        %v468 = vunpack.c.l.s4 1966171168
        %v469 = vunpack.c.0.s8 %v468
        %v470 = vlaneseq
        %v471 = vshrl.u32 %v470, 7
        %v472 = vsub.s32 %v469, %v471
        %v473 = vrot.slane %v451, %v472
        %v475 = vunpack.c.l.s4 1966171168
        %v476 = vunpack.c.0.s8 %v475
        %v477 = vlaneseq
        %v478 = vshrl.u32 %v477, 7
        %v479 = vsub.s32 %v476, %v478
        %v480 = vrot.slane %v452, %v479
        %v481 = vcombine.high %v459, %v459
        %v482 = vcombine.high %v466, %v466
        %v483 = vcombine.high %v473, %v473
        %v484 = vcombine.high %v480, %v480
        %v621 = vunpack.c.l.b16 %v300
        %v622 = vunpack.c.l.b16 %v301
        %v623 = vunpack.c.l.b16 %v302
        %v624 = vunpack.c.l.b16 %v303
        %v625 = vunpack.c.l.b16 %v304
        %v626 = vunpack.c.l.b16 %v305
        %v627 = vunpack.c.l.b16 %v306
        %v628 = vunpack.c.l.b16 %v307
        %v629 = vunpack.c.l.b16 %v308
        %v630 = vunpack.c.l.b16 %v309
        %v631 = vunpack.c.l.b16 %v310
        %v632 = vunpack.c.l.b16 %v311
        %v633 = vunpack.c.l.b16 %v312
        %v634 = vunpack.c.l.b16 %v313
        %v635 = vunpack.c.l.b16 %v314
        %v636 = vunpack.c.l.b16 %v315
        %v637 = vunpack.c.l.b16 %v316
        %v638 = vunpack.c.l.b16 %v317
        %v639 = vunpack.c.l.b16 %v318
        %v640 = vunpack.c.l.b16 %v319
        %v641 = vunpack.c.l.b16 %v320
        %v642 = vunpack.c.l.b16 %v321
        %v643 = vunpack.c.l.b16 %v322
        %v644 = vunpack.c.l.b16 %v323
        %v645 = vunpack.c.l.b16 %v324
        %v646 = vunpack.c.l.b16 %v325
        %v647 = vunpack.c.l.b16 %v326
        %v648 = vunpack.c.l.b16 %v327
        %v649 = vunpack.c.l.b16 %v328
        %v650 = vunpack.c.l.b16 %v329
        %v651 = vunpack.c.l.b16 %v330
        %v652 = vunpack.c.l.b16 %v331
        %v653 = vunpack.c.l.b16 %v332
        %v654 = vunpack.c.l.b16 %v333
        %v655 = vunpack.c.l.b16 %v334
        %v656 = vunpack.c.l.b16 %v335
        %v657 = vunpack.c.l.b16 %v336
        %v658 = vunpack.c.l.b16 %v337
        %v659 = vunpack.c.l.b16 %v338
        %v660 = vunpack.c.l.b16 %v339
        %v661 = vunpack.c.l.b16 %v340
        %v662 = vunpack.c.l.b16 %v341
        %v663 = vunpack.c.l.b16 %v342
        %v664 = vunpack.c.l.b16 %v343
        %v665 = vunpack.c.l.b16 %v344
        %v666 = vunpack.c.l.b16 %v345
        %v667 = vunpack.c.l.b16 %v346
        %v668 = vunpack.c.l.b16 %v347
        %v669 = vunpack.c.l.b16 %v348
        %v670 = vunpack.c.l.b16 %v349
        %v671 = vunpack.c.l.b16 %v350
        %v672 = vunpack.c.l.b16 %v351
        %v673 = vunpack.c.l.b16 %v352
        %v674 = vunpack.c.l.b16 %v353
        %v675 = vunpack.c.l.b16 %v354
        %v676 = vunpack.c.l.b16 %v355
        %v677 = vunpack.c.l.b16 %v356
        %v678 = vunpack.c.l.b16 %v357
        %v679 = vunpack.c.l.b16 %v358
        %v680 = vunpack.c.l.b16 %v359
        %v681 = vunpack.c.l.b16 %v360
        %v682 = vunpack.c.l.b16 %v361
        %v683 = vunpack.c.l.b16 %v362
        %v684 = vunpack.c.l.b16 %v363
        %v685 = vunpack.c.l.b16 %v364
        %v686 = vunpack.c.l.b16 %v365
        %v687 = vunpack.c.l.b16 %v366
        %v688 = vunpack.c.l.b16 %v367
        %v689 = vunpack.c.l.b16 %v368
        %v690 = vunpack.c.l.b16 %v369
        %v691 = vunpack.c.l.b16 %v370
        %v692 = vunpack.c.l.b16 %v371
        %v693 = vunpack.c.l.b16 %v372
        %v694 = vunpack.c.l.b16 %v373
        %v695 = vunpack.c.l.b16 %v374
        %v696 = vunpack.c.l.b16 %v375
        %v697 = vunpack.c.l.b16 %v376
        %v698 = vunpack.c.l.b16 %v377
        %v699 = vunpack.c.l.b16 %v378
        %v700 = vunpack.c.l.b16 %v379
        %v701 = vunpack.c.l.b16 %v380
        %v702 = vunpack.c.l.b16 %v381
        %v703 = vunpack.c.l.b16 %v382
        %v704 = vunpack.c.l.b16 %v383
        %v705 = vunpack.c.l.b16 %v384
        %v706 = vunpack.c.l.b16 %v385
        %v707 = vunpack.c.l.b16 %v386
        %v708 = vunpack.c.l.b16 %v387
        %v709 = vunpack.c.l.b16 %v388
        %v710 = vunpack.c.l.b16 %v389
        %v711 = vunpack.c.l.b16 %v390
        %v712 = vunpack.c.l.b16 %v391
        %v713 = vunpack.c.l.b16 %v392
        %v714 = vunpack.c.l.b16 %v393
        %v715 = vunpack.c.l.b16 %v394
        %v716 = vunpack.c.l.b16 %v395
        %v717 = vunpack.c.l.b16 %v396
        %v718 = vunpack.c.l.b16 %v397
        %v719 = vunpack.c.l.b16 %v398
        %v720 = vunpack.c.l.b16 %v399
        %v721 = vunpack.c.l.b16 %v400
        %v722 = vunpack.c.l.b16 %v401
        %v723 = vunpack.c.l.b16 %v402
        %v724 = vunpack.c.l.b16 %v403
        %v725 = vunpack.c.l.b16 %v404
        %v726 = vunpack.c.l.b16 %v405
        %v727 = vunpack.c.l.b16 %v406
        %v728 = vunpack.c.l.b16 %v407
        %v729 = vunpack.c.l.b16 %v408
        %v730 = vunpack.c.l.b16 %v409
        %v731 = vunpack.c.l.b16 %v410
        %v732 = vunpack.c.l.b16 %v411
        %v733 = vunpack.c.l.b16 %v412
        %v734 = vunpack.c.l.b16 %v413
        %v735 = vunpack.c.l.b16 %v414
        %v736 = vunpack.c.l.b16 %v415
        %v737 = vunpack.c.l.b16 %v416
        %v738 = vunpack.c.l.b16 %v417
        %v739 = vunpack.c.l.b16 %v418
        %v740 = vunpack.c.l.b16 %v419
        %v741 = vunpack.c.l.b16 %v420
        %v742 = vunpack.c.l.b16 %v421
        %v743 = vunpack.c.l.b16 %v422
        %v744 = vunpack.c.l.b16 %v423
        %v745 = vunpack.c.l.b16 %v424
        %v746 = vunpack.c.l.b16 %v425
        %v747 = vunpack.c.l.b16 %v426
        %v748 = vunpack.c.l.b16 %v427
        %v749 = vpack.c.b16 %v622, %v621
        %v750 = vpack.c.b16 %v624, %v623
        %v751 = vpack.c.b16 %v626, %v625
        %v752 = vpack.c.b16 %v628, %v627
        %v753 = vpack.c.b16 %v630, %v629
        %v754 = vpack.c.b16 %v632, %v631
        %v755 = vpack.c.b16 %v634, %v633
        %v756 = vpack.c.b16 %v636, %v635
        %v757 = vpack.c.b16 %v638, %v637
        %v758 = vpack.c.b16 %v640, %v639
        %v759 = vpack.c.b16 %v642, %v641
        %v760 = vpack.c.b16 %v644, %v643
        %v761 = vpack.c.b16 %v646, %v645
        %v762 = vpack.c.b16 %v648, %v647
        %v763 = vpack.c.b16 %v650, %v649
        %v764 = vpack.c.b16 %v652, %v651
        %v765 = vpack.c.b16 %v654, %v653
        %v766 = vpack.c.b16 %v656, %v655
        %v767 = vpack.c.b16 %v658, %v657
        %v768 = vpack.c.b16 %v660, %v659
        %v769 = vpack.c.b16 %v662, %v661
        %v770 = vpack.c.b16 %v664, %v663
        %v771 = vpack.c.b16 %v666, %v665
        %v772 = vpack.c.b16 %v668, %v667
        %v773 = vpack.c.b16 %v670, %v669
        %v774 = vpack.c.b16 %v672, %v671
        %v775 = vpack.c.b16 %v674, %v673
        %v776 = vpack.c.b16 %v676, %v675
        %v777 = vpack.c.b16 %v678, %v677
        %v778 = vpack.c.b16 %v680, %v679
        %v779 = vpack.c.b16 %v682, %v681
        %v780 = vpack.c.b16 %v684, %v683
        %v781 = vpack.c.b16 %v686, %v685
        %v782 = vpack.c.b16 %v688, %v687
        %v783 = vpack.c.b16 %v690, %v689
        %v784 = vpack.c.b16 %v692, %v691
        %v785 = vpack.c.b16 %v694, %v693
        %v786 = vpack.c.b16 %v696, %v695
        %v787 = vpack.c.b16 %v698, %v697
        %v788 = vpack.c.b16 %v700, %v699
        %v789 = vpack.c.b16 %v702, %v701
        %v790 = vpack.c.b16 %v704, %v703
        %v791 = vpack.c.b16 %v706, %v705
        %v792 = vpack.c.b16 %v708, %v707
        %v793 = vpack.c.b16 %v710, %v709
        %v794 = vpack.c.b16 %v712, %v711
        %v795 = vpack.c.b16 %v714, %v713
        %v796 = vpack.c.b16 %v716, %v715
        %v797 = vpack.c.b16 %v718, %v717
        %v798 = vpack.c.b16 %v720, %v719
        %v799 = vpack.c.b16 %v722, %v721
        %v800 = vpack.c.b16 %v724, %v723
        %v801 = vpack.c.b16 %v726, %v725
        %v802 = vpack.c.b16 %v728, %v727
        %v803 = vpack.c.b16 %v730, %v729
        %v804 = vpack.c.b16 %v732, %v731
        %v805 = vpack.c.b16 %v734, %v733
        %v806 = vpack.c.b16 %v736, %v735
        %v807 = vpack.c.b16 %v738, %v737
        %v808 = vpack.c.b16 %v740, %v739
        %v809 = vpack.c.b16 %v742, %v741
        %v810 = vpack.c.b16 %v744, %v743
        %v811 = vpack.c.b16 %v746, %v745
        %v812 = vpack.c.b16 %v748, %v747
        %877 = vmatprep.subr.bf16.mxu0 0
        %878 = vmatpush1.bf16.msra.mxu0 %v749
        %879 = vmatprep.subr.bf16.mxu0 0
        %880 = vmatpush1.bf16.msra.mxu0 %v750
        %881 = vmatprep.subr.bf16.mxu0 0
        %882 = vmatpush1.bf16.msra.mxu0 %v751
        %883 = vmatprep.subr.bf16.mxu0 0
        %884 = vmatpush1.bf16.msra.mxu0 %v752
        %885 = vmatprep.subr.bf16.mxu0 0
        %886 = vmatpush1.bf16.msra.mxu0 %v753
        %887 = vmatprep.subr.bf16.mxu0 0
        %888 = vmatpush1.bf16.msra.mxu0 %v754
        %889 = vmatprep.subr.bf16.mxu0 0
        %890 = vmatpush1.bf16.msra.mxu0 %v755
        %891 = vmatprep.subr.bf16.mxu0 0
        %892 = vmatpush1.bf16.msra.mxu0 %v756
        %893 = vmatprep.subr.bf16.mxu0 0
        %894 = vmatpush1.bf16.msra.mxu0 %v757
        %895 = vmatprep.subr.bf16.mxu0 0
        %896 = vmatpush1.bf16.msra.mxu0 %v758
        %897 = vmatprep.subr.bf16.mxu0 0
        %898 = vmatpush1.bf16.msra.mxu0 %v759
        %899 = vmatprep.subr.bf16.mxu0 0
        %900 = vmatpush1.bf16.msra.mxu0 %v760
        %901 = vmatprep.subr.bf16.mxu0 0
        %902 = vmatpush1.bf16.msra.mxu0 %v761
        %903 = vmatprep.subr.bf16.mxu0 0
        %904 = vmatpush1.bf16.msra.mxu0 %v762
        %905 = vmatprep.subr.bf16.mxu0 0
        %906 = vmatpush1.bf16.msra.mxu0 %v763
        %907 = vmatprep.subr.bf16.mxu0 0
        %908 = vmatpush1.bf16.msra.mxu0 %v764
        %909 = vmatprep.mubr.bf16.mxu0 %v473
        %910 = vmatmul.mubr.bf16.gmra.mrb[0].mxu0 %v459
        %v911 = vpop.f32.mrb[0].mxu0
        %v912 = vadd.f32 %v433, %v911
        %v913 = vpop.f32.mrb[0].mxu0
        %v914 = vpop.f32.mrb[0].mxu0
        %v915 = vpop.f32.mrb[0].mxu0
        %916 = vdwg.mxu0
        %917 = vmatprep.subr.bf16.mxu0 0
        %918 = vmatpush1.bf16.msra.mxu0 %v765
        %919 = vmatprep.subr.bf16.mxu0 0
        %920 = vmatpush1.bf16.msra.mxu0 %v766
        %921 = vmatprep.subr.bf16.mxu0 0
        %922 = vmatpush1.bf16.msra.mxu0 %v767
        %923 = vmatprep.subr.bf16.mxu0 0
        %924 = vmatpush1.bf16.msra.mxu0 %v768
        %925 = vmatprep.subr.bf16.mxu0 0
        %926 = vmatpush1.bf16.msra.mxu0 %v769
        %927 = vmatprep.subr.bf16.mxu0 0
        %928 = vmatpush1.bf16.msra.mxu0 %v770
        %929 = vmatprep.subr.bf16.mxu0 0
        %930 = vmatpush1.bf16.msra.mxu0 %v771
        %931 = vmatprep.subr.bf16.mxu0 0
        %932 = vmatpush1.bf16.msra.mxu0 %v772
        %933 = vmatprep.subr.bf16.mxu0 0
        %934 = vmatpush1.bf16.msra.mxu0 %v773
        %935 = vmatprep.subr.bf16.mxu0 0
        %936 = vmatpush1.bf16.msra.mxu0 %v774
        %937 = vmatprep.subr.bf16.mxu0 0
        %938 = vmatpush1.bf16.msra.mxu0 %v775
        %939 = vmatprep.subr.bf16.mxu0 0
        %940 = vmatpush1.bf16.msra.mxu0 %v776
        %941 = vmatprep.subr.bf16.mxu0 0
        %942 = vmatpush1.bf16.msra.mxu0 %v777
        %943 = vmatprep.subr.bf16.mxu0 0
        %944 = vmatpush1.bf16.msra.mxu0 %v778
        %945 = vmatprep.subr.bf16.mxu0 0
        %946 = vmatpush1.bf16.msra.mxu0 %v779
        %947 = vmatprep.subr.bf16.mxu0 0
        %948 = vmatpush1.bf16.msra.mxu0 %v780
        %949 = vmatprep.mubr.bf16.mxu0 %v483
        %950 = vmatmul.mubr.bf16.gmra.mrb[0].mxu0 %v481
        %v951 = vpop.f32.mrb[0].mxu0
        %v952 = vadd.f32 %v912, %v951
        %v953 = vpop.f32.mrb[0].mxu0
        %v954 = vpop.f32.mrb[0].mxu0
        %v955 = vpop.f32.mrb[0].mxu0
        %956 = vdwg.mxu0
        %957 = vmatprep.subr.bf16.mxu0 0
        %958 = vmatpush1.bf16.msra.mxu0 %v781
        %959 = vmatprep.subr.bf16.mxu0 0
        %960 = vmatpush1.bf16.msra.mxu0 %v782
        %961 = vmatprep.subr.bf16.mxu0 0
        %962 = vmatpush1.bf16.msra.mxu0 %v783
        %963 = vmatprep.subr.bf16.mxu0 0
        %964 = vmatpush1.bf16.msra.mxu0 %v784
        %965 = vmatprep.subr.bf16.mxu0 0
        %966 = vmatpush1.bf16.msra.mxu0 %v785
        %967 = vmatprep.subr.bf16.mxu0 0
        %968 = vmatpush1.bf16.msra.mxu0 %v786
        %969 = vmatprep.subr.bf16.mxu0 0
        %970 = vmatpush1.bf16.msra.mxu0 %v787
        %971 = vmatprep.subr.bf16.mxu0 0
        %972 = vmatpush1.bf16.msra.mxu0 %v788
        %973 = vmatprep.subr.bf16.mxu0 0
        %974 = vmatpush1.bf16.msra.mxu0 %v789
        %975 = vmatprep.subr.bf16.mxu0 0
        %976 = vmatpush1.bf16.msra.mxu0 %v790
        %977 = vmatprep.subr.bf16.mxu0 0
        %978 = vmatpush1.bf16.msra.mxu0 %v791
        %979 = vmatprep.subr.bf16.mxu0 0
        %980 = vmatpush1.bf16.msra.mxu0 %v792
        %981 = vmatprep.subr.bf16.mxu0 0
        %982 = vmatpush1.bf16.msra.mxu0 %v793
        %983 = vmatprep.subr.bf16.mxu0 0
        %984 = vmatpush1.bf16.msra.mxu0 %v794
        %985 = vmatprep.subr.bf16.mxu0 0
        %986 = vmatpush1.bf16.msra.mxu0 %v795
        %987 = vmatprep.subr.bf16.mxu0 0
        %988 = vmatpush1.bf16.msra.mxu0 %v796
        %989 = vmatprep.mubr.bf16.mxu0 %v480
        %990 = vmatmul.mubr.bf16.gmra.mrb[0].mxu0 %v466
        %v991 = vpop.f32.mrb[0].mxu0
        %v992 = vadd.f32 %v952, %v991
        %v993 = vpop.f32.mrb[0].mxu0
        %v994 = vpop.f32.mrb[0].mxu0
        %v995 = vpop.f32.mrb[0].mxu0
        %996 = vdwg.mxu0
        %997 = vmatprep.subr.bf16.mxu0 0
        %998 = vmatpush1.bf16.msra.mxu0 %v797
        %999 = vmatprep.subr.bf16.mxu0 0
        %1000 = vmatpush1.bf16.msra.mxu0 %v798
        %1001 = vmatprep.subr.bf16.mxu0 0
        %1002 = vmatpush1.bf16.msra.mxu0 %v799
        %1003 = vmatprep.subr.bf16.mxu0 0
        %1004 = vmatpush1.bf16.msra.mxu0 %v800
        %1005 = vmatprep.subr.bf16.mxu0 0
        %1006 = vmatpush1.bf16.msra.mxu0 %v801
        %1007 = vmatprep.subr.bf16.mxu0 0
        %1008 = vmatpush1.bf16.msra.mxu0 %v802
        %1009 = vmatprep.subr.bf16.mxu0 0
        %1010 = vmatpush1.bf16.msra.mxu0 %v803
        %1011 = vmatprep.subr.bf16.mxu0 0
        %1012 = vmatpush1.bf16.msra.mxu0 %v804
        %1013 = vmatprep.subr.bf16.mxu0 0
        %1014 = vmatpush1.bf16.msra.mxu0 %v805
        %1015 = vmatprep.subr.bf16.mxu0 0
        %1016 = vmatpush1.bf16.msra.mxu0 %v806
        %1017 = vmatprep.subr.bf16.mxu0 0
        %1018 = vmatpush1.bf16.msra.mxu0 %v807
        %1019 = vmatprep.subr.bf16.mxu0 0
        %1020 = vmatpush1.bf16.msra.mxu0 %v808
        %1021 = vmatprep.subr.bf16.mxu0 0
        %1022 = vmatpush1.bf16.msra.mxu0 %v809
        %1023 = vmatprep.subr.bf16.mxu0 0
        %1024 = vmatpush1.bf16.msra.mxu0 %v810
        %1025 = vmatprep.subr.bf16.mxu0 0
        %1026 = vmatpush1.bf16.msra.mxu0 %v811
        %1027 = vmatprep.subr.bf16.mxu0 0
        %1028 = vmatpush1.bf16.msra.mxu0 %v812
        %1029 = vmatprep.mubr.bf16.mxu0 %v484
        %1030 = vmatmul.mubr.bf16.gmra.mrb[0].mxu0 %v482
        %v1031 = vpop.f32.mrb[0].mxu0
        %v1032 = vadd.f32 %v992, %v1031
        %v1033 = vpop.f32.mrb[0].mxu0
        %v1034 = vpop.f32.mrb[0].mxu0
        %v1035 = vpop.f32.mrb[0].mxu0
        %1036 = vdwg.mxu0
        %v1037 = vsub.f32 0.0, %v1032
        %v1038 = vmul.f32 %v1037, 1.442695
        %v1039 = vpow.pop %v1038
        %v1040 = vld [vmem:[#allocation2] sm:$0x3]
        %v1041 = vsub.f32 1.0, %v1039
        %v1042 = vmul.f32 %v1040, %v1041
        %s1043 = sadd.s32 %s31, 1
        %s1044 = scvt.s32.f32 %s1043
        %v1045 = vld [vmem:[%s283] sm:$0x3]
        %v1046 = vstv %s1044
        %v1047 = vmul.f32 %v1046, %v1042
        %v1048 = vadd.f32 %v1045, %v1047
        %1049 = vst [vmem:[%s283] sm:$0x3] %v1048
        %v1050 = vld [vmem:[%s290] sm:$0x3]
        %v1051 = vadd.f32 %v1050, %v1042
        %1052 = vst [vmem:[%s290] sm:$0x3] %v1051
        %v1053 = vld [vmem:[#allocation2] sm:$0x3]
        %v1054 = vmul.f32 %v1053, %v1039
        %1055 = vst [vmem:[#allocation2] sm:$0x3] %v1054
        %s1056 = sand.u32 %s123, 1
        %s1057 = scalar_lea.sflag [#allocation5], %s1056
        %s1058 = sand.u32 %s123, 1
        %s1059 = smul.addr %s1058, 2
        %s1060 = scalar_lea.vmem [#allocation9], %s1059
        %s1061 = sand.u32 %s149, 1
        %s1062 = scalar_lea.sflag [#allocation11], %s1061
        %s1063 = sand.u32 %s149, 1
        %s1064 = smul.addr %s1063, 2
        %s1065 = scalar_lea.vmem [#allocation10], %s1064
        // Predicated region
        $region49: #{tpu_custom_call.1} parent=31 // pred_check
          %p1066 = pneg %p133
        $region50: #{tpu_custom_call.1} parent=31 // pred_check_branch
          %1068 = sbr.rel (%p1066) target = $region52
        $region51: #{tpu_custom_call.1} parent=31 // pred_region
          %s1070 = ssub.s32 32, 32
          %1071 = vsyncadd %s1057, %s1070
          %s1072 = smul.addr %s30, 32
          %s1073 = scalar_lea.hbm %s3, %s1072
          %s1075 = sshll.u32 %s1060, 4
          %s1076 = int_to_ptr.vmem [resolvable:$true] %s1075
          %1078 = dma.vmem_to_hbm [thread:$0]  %s1076, 32, %s1073, %s1057
        $region52: #{tpu_custom_call.1} parent=31 // pred_fallthru
          _
        // Predicated region
        $region53: #{tpu_custom_call.1} parent=31 // pred_check
          %p1079 = pneg %p159
        $region54: #{tpu_custom_call.1} parent=31 // pred_check_branch
          %1081 = sbr.rel (%p1079) target = $region56
        $region55: #{tpu_custom_call.1} parent=31 // pred_region
          %s1083 = ssub.s32 32, 32
          %1084 = vsyncadd %s1062, %s1083
          %s1085 = smul.addr %s30, 32
          %s1086 = scalar_lea.hbm %s4, %s1085
          %s1088 = sshll.u32 %s1065, 4
          %s1089 = int_to_ptr.vmem [resolvable:$true] %s1088
          %1091 = dma.vmem_to_hbm [thread:$0]  %s1089, 32, %s1086, %s1062
        $region56: #{tpu_custom_call.1} parent=31 // pred_fallthru
          _
      $region32: #{tpu_custom_call.1} parent=5 // pred_fallthru
        _
      %p1092 = scmp.le.s32.totalorder 2, %s21
      // Predicated region
      $region57: #{tpu_custom_call.1} parent=5 // pred_check
        %p1093 = pneg %p1092
      $region58: #{tpu_custom_call.1} parent=5 // pred_check_branch
        %1095 = sbr.rel (%p1093) target = $region60
      $region59: #{tpu_custom_call.1} parent=5 // pred_region
        %s1096 = ssub.s32 %s21, 2
        // Predicated region
        $region61: #{tpu_custom_call.1} parent=59 // pred_check
          %p1097 = pneg %p139
        $region62: #{tpu_custom_call.1} parent=59 // pred_check_branch
          %1099 = sbr.rel (%p1097) target = $region64
        $region63: #{tpu_custom_call.1} parent=59 // pred_region
          %s1100 = sand.u32 %s124, 1
          %s1101 = scalar_lea.sflag [#allocation5], %s1100
          %s1102 = sand.u32 %s124, 1
          %s1103 = smul.addr %s1102, 2
          %s1104 = scalar_lea.vmem [#allocation9], %s1103
          %1105 = dma.done %s1101, 32
        $region64: #{tpu_custom_call.1} parent=59 // pred_fallthru
          _
        // Predicated region
        $region65: #{tpu_custom_call.1} parent=59 // pred_check
          %p1106 = pneg %p165
        $region66: #{tpu_custom_call.1} parent=59 // pred_check_branch
          %1108 = sbr.rel (%p1106) target = $region68
        $region67: #{tpu_custom_call.1} parent=59 // pred_region
          %s1109 = sand.u32 %s150, 1
          %s1110 = scalar_lea.sflag [#allocation11], %s1109
          %s1111 = sand.u32 %s150, 1
          %s1112 = smul.addr %s1111, 2
          %s1113 = scalar_lea.vmem [#allocation10], %s1112
          %1114 = dma.done %s1110, 32
        $region68: #{tpu_custom_call.1} parent=59 // pred_fallthru
          _
      $region60: #{tpu_custom_call.1} parent=5 // pred_fallthru
        _
    $region6: #{tpu_custom_call.1} parent=1 // loop_footer
      %s25 = sadd.s32 1, %s21
    $region7: #{tpu_custom_call.1} parent=1 // loop_footer_branch
      %20 = sbr.rel target = $region3
    $region8: #{tpu_custom_call.1} parent=1 // loop_exit
      _
    %1115 = vsyncpa [#allocation4], 1
    %s1116 = scalar_lea.sflag [#allocation4], 1
    %1117 = vsyncpa %s1116, 1
    %1118 = vsyncpa [#allocation7], 1
    %s1119 = scalar_lea.sflag [#allocation7], 1
    %1120 = vsyncpa %s1119, 1
    %1121 = vsyncpa [#allocation5], 1
    %s1122 = scalar_lea.sflag [#allocation5], 1
    %1123 = vsyncpa %s1122, 1
    %1124 = vsyncpa [#allocation11], 1
    %s1125 = scalar_lea.sflag [#allocation11], 1
    %1126 = vsyncpa %s1125, 1

</llo_original>
